<compile_context>
chip_gen: v5e
topology: v5e:2x2
jax: 0.10.0
libtpu: 0.0.40
codegen_flags: <defaults>
</compile_context>

<pallas_src>
import functools

import numpy as np
import jax
import jax.numpy as jnp
from jax.experimental import pallas as pl
from jax.experimental.pallas import tpu as pltpu


_BASE_STENCILS = np.array(
    [
        [[0, 0, 0], [1, 0, -1], [0, 0, 0]],
        [[0, -1, 0], [0, 0, 0], [0, 1, 0]],
        [[0, 0, 0], [-1, 2, -1], [0, 0, 0]],
        [[0, -1, 0], [0, 2, 0], [0, -1, 0]],
        [[-1, 0, 1], [0, 0, 0], [1, 0, -1]],
    ],
    dtype=np.float32,
)  # (5, 3, 3)


def _order2_kernel(x_ref, w_ref, m_ref, o_ref, xp_ref, *, W, L, PL):
    """One batch element per grid step, flattened-spatial (lane-dense) layout.

    x_ref : (1, C, L)        input image, L = H*W flattened on the lane axis
    w_ref : (9, C, 1)  f32   per-tap per-channel weights, tap t = (di+1)*3 + (dj+1)
    m_ref : (2, L)     f32   column-validity masks: row 0 -> dj=-1 (0 where w==0),
                             row 1 -> dj=+1 (0 where w==W-1)
    o_ref : (1, C, L)        output
    xp_ref: (C, L+2*PL) f32  scratch slab with a PL = W+1 wide zero halo per side
    """
    C = x_ref.shape[1]

    # Zero the halo strips, stage the image into the slab (single f32 cast).
    zpad = jnp.zeros((C, PL), dtype=jnp.float32)
    xp_ref[:, 0:PL] = zpad
    xp_ref[:, PL + L:PL + L + PL] = zpad
    xp_ref[:, PL:PL + L] = x_ref[0].astype(jnp.float32)

    acc = jnp.zeros((C, L), dtype=jnp.float32)
    for dj in (-1, 0, 1):
        if dj == -1:
            cmask = m_ref[0:1, :]          # (1, L): zero where w == 0
        elif dj == 1:
            cmask = m_ref[1:2, :]          # (1, L): zero where w == W-1
        else:
            cmask = None
        for di in (-1, 0, 1):
            t = (di + 1) * 3 + (dj + 1)
            off = PL + di * W + dj
            xs = xp_ref[:, off:off + L]    # zero-filled flat shift, (C, L)
            if cmask is not None:
                xs = xs * cmask            # kill cross-row wrap of the +/-1 column taps
            acc = acc + w_ref[t] * xs      # (C, 1) weight column broadcast over lanes

    o_ref[0] = acc.astype(o_ref.dtype)


def order2_conv2d(x: jax.Array, ratio: float = 1.0) -> jax.Array:
    """Pallas equivalent of Order2Conv2d.forward (kernel=3, stride=1, pad=1, dil=1)."""
    N, C, H, W = x.shape
    inp = int(C * ratio) // 5 * 5
    if inp < 5 or inp > C:
        raise ValueError(
            f"Order2Conv2d needs 5 <= int(C*ratio)//5*5 <= C (got C={C}, ratio={ratio}).")

    L = H * W
    PL = W + 1  # halo width on each side of the flattened spatial axis

    # Per-channel stencils: the five fixed kernels (tiled) for the first `inp`
    # channels, identity for the passthrough channels -> one uniform depthwise
    # stencil produces conv + passthrough in a single write (no concat pass).
    w_ch = np.zeros((C, 3, 3), dtype=np.float32)
    w_ch[:inp] = np.tile(_BASE_STENCILS, (inp // 5, 1, 1))
    w_ch[inp:, 1, 1] = 1.0
    w_taps = jnp.asarray(w_ch.transpose(1, 2, 0).reshape(9, C, 1))  # tap-major

    # Column-validity masks on the flattened spatial axis (built host-side, tiny).
    col = np.arange(L, dtype=np.int64) % W
    cmasks = jnp.asarray(np.stack([(col != 0), (col != W - 1)]).astype(np.float32))

    # Lane-dense layout: H*W on the lane axis (free metadata reshape of NCHW).
    x_r = x.reshape(N, C, L)

    kernel = functools.partial(_order2_kernel, W=W, L=L, PL=PL)

    itemsize = x.dtype.itemsize
    blk_bytes = C * L * itemsize
    scratch_bytes = C * (L + 2 * PL) * 4
    aux_bytes = (9 * C + 2 * L) * 4 * 2
    est = 2 * blk_bytes + 2 * blk_bytes + scratch_bytes + aux_bytes  # double-buffered io
    vmem_limit = int(min(max(2 * est, 16 * 1024 * 1024), 96 * 1024 * 1024))

    flops = 2 * 9 * N * C * L
    bytes_accessed = 2 * N * C * L * itemsize + int(w_taps.size + cmasks.size) * 4

    out_r = pl.pallas_call(
        kernel,
        out_shape=jax.ShapeDtypeStruct((N, C, L), x.dtype),
        grid=(N,),
        in_specs=[
            pl.BlockSpec((1, C, L), lambda n: (n, 0, 0)),
            pl.BlockSpec((9, C, 1), lambda n: (0, 0, 0)),
            pl.BlockSpec((2, L), lambda n: (0, 0)),
        ],
        out_specs=pl.BlockSpec((1, C, L), lambda n: (n, 0, 0)),
        scratch_shapes=[pltpu.VMEM((C, L + 2 * PL), jnp.float32)],
        compiler_params=pltpu.CompilerParams(
            dimension_semantics=("parallel",),
            vmem_limit_bytes=vmem_limit,
        ),
        cost_estimate=pl.CostEstimate(
            flops=flops, transcendentals=0, bytes_accessed=bytes_accessed),
    )(x_r, w_taps, cmasks)

    return out_r.reshape(N, C, H, W)


if __name__ == "__main__":
    key = jax.random.PRNGKey(0)
    N, C, H, W = 2, 12, 16, 16  # inp = 10 conv channels, 2 passthrough channels
    x = jax.random.normal(key, (N, C, H, W), dtype=jnp.float32)

    out = jax.block_until_ready(order2_conv2d(x, ratio=1.0))
    assert out.shape == (N, C, H, W), out.shape

    # Reference: XLA grouped (depthwise) convolution + passthrough concat.
    inp = int(C * 1.0) // 5 * 5
    w_ref = jnp.asarray(np.tile(_BASE_STENCILS, (inp // 5, 1, 1)).reshape(inp, 1, 3, 3))
    ref_conv = jax.lax.conv_general_dilated(
        x[:, :inp], w_ref,
        window_strides=(1, 1), padding=((1, 1), (1, 1)),
        dimension_numbers=("NCHW", "OIHW", "NCHW"),
        feature_group_count=inp,
    )
    ref = jnp.concatenate([ref_conv, x[:, inp:]], axis=1)
    err = float(jnp.max(jnp.abs(out - ref)))
    assert jnp.allclose(out, ref, atol=1e-5, rtol=1e-5), err

    print("KERNEL_OK")
</pallas_src>

<mosaic_0001>
module attributes {stable_mosaic.version = 11 : i64} {
  func.func @_order2_kernel(%arg0: i32, %arg1: memref<1x12x256xf32, #tpu.memory_space<vmem>>, %arg2: memref<9x12x1xf32, #tpu.memory_space<vmem>>, %arg3: memref<2x256xf32, #tpu.memory_space<vmem>>, %arg4: memref<1x12x256xf32, #tpu.memory_space<vmem>>, %arg5: memref<12x290xf32, #tpu.memory_space<vmem>>) attributes {dimension_semantics = [#tpu.dimension_semantics<parallel>], iteration_bounds = array<i64: 2>, scalar_prefetch = 0 : i64, scratch_operands = 1 : i64, tpu.core_type = #tpu.core_type<tc>, window_params = [{transform_indices = @transform_0, window_bounds = array<i64: 1, 12, 256>}, {pipeline_mode = #tpu.pipeline_mode<synchronous>, transform_indices = @transform_1, window_bounds = array<i64: 9, 12, 1>}, {pipeline_mode = #tpu.pipeline_mode<synchronous>, transform_indices = @transform_2, window_bounds = array<i64: 2, 256>}, {transform_indices = @transform_3, window_bounds = array<i64: 1, 12, 256>}]} {
    %cst = arith.constant 0.000000e+00 : f32
    %0 = vector.broadcast %cst : f32 to vector<12x17xf32>
    %c0 = arith.constant 0 : index
    %c0_0 = arith.constant 0 : index
    %1 = vector.load %arg5[%c0, %c0_0] : memref<12x290xf32, #tpu.memory_space<vmem>>, vector<12x17xf32>
    tpu.vector_store %arg5[%c0, %c0_0], %0 {strides = array<i32>} : memref<12x290xf32, #tpu.memory_space<vmem>>, vector<12x17xf32>,
    %c0_1 = arith.constant 0 : index
    %c273 = arith.constant 273 : index
    %2 = vector.load %arg5[%c0_1, %c273] : memref<12x290xf32, #tpu.memory_space<vmem>>, vector<12x17xf32>
    tpu.vector_store %arg5[%c0_1, %c273], %0 {strides = array<i32>} : memref<12x290xf32, #tpu.memory_space<vmem>>, vector<12x17xf32>,
    %c0_2 = arith.constant 0 : index
    %c0_3 = arith.constant 0 : index
    %c0_4 = arith.constant 0 : index
    %3 = vector.load %arg1[%c0_2, %c0_3, %c0_4] : memref<1x12x256xf32, #tpu.memory_space<vmem>>, vector<1x12x256xf32>
    %4 = vector.shape_cast %3 : vector<1x12x256xf32> to vector<12x256xf32>
    %c0_5 = arith.constant 0 : index
    %c17 = arith.constant 17 : index
    %5 = vector.load %arg5[%c0_5, %c17] : memref<12x290xf32, #tpu.memory_space<vmem>>, vector<12x256xf32>
    tpu.vector_store %arg5[%c0_5, %c17], %4 {strides = array<i32>} : memref<12x290xf32, #tpu.memory_space<vmem>>, vector<12x256xf32>,
    %cst_6 = arith.constant 0.000000e+00 : f32
    %6 = vector.broadcast %cst_6 : f32 to vector<12x256xf32>
    %c0_7 = arith.constant 0 : index
    %c0_8 = arith.constant 0 : index
    %7 = vector.load %arg3[%c0_7, %c0_8] : memref<2x256xf32, #tpu.memory_space<vmem>>, vector<1x256xf32>
    %c0_9 = arith.constant 0 : index
    %c0_10 = arith.constant 0 : index
    %8 = vector.load %arg5[%c0_9, %c0_10] : memref<12x290xf32, #tpu.memory_space<vmem>>, vector<12x256xf32>
    %9 = vector.broadcast %7 : vector<1x256xf32> to vector<12x256xf32>
    %10 = arith.mulf %8, %9 : vector<12x256xf32>
    %c0_11 = arith.constant 0 : index
    %c0_12 = arith.constant 0 : index
    %c0_13 = arith.constant 0 : index
    %11 = vector.load %arg2[%c0_11, %c0_12, %c0_13] : memref<9x12x1xf32, #tpu.memory_space<vmem>>, vector<1x12x1xf32>
    %12 = vector.shape_cast %11 : vector<1x12x1xf32> to vector<12x1xf32>
    %13 = vector.broadcast %12 : vector<12x1xf32> to vector<12x256xf32>
    %14 = arith.mulf %13, %10 : vector<12x256xf32>
    %15 = arith.addf %6, %14 : vector<12x256xf32>
    %c0_14 = arith.constant 0 : index
    %c16 = arith.constant 16 : index
    %16 = vector.load %arg5[%c0_14, %c16] : memref<12x290xf32, #tpu.memory_space<vmem>>, vector<12x256xf32>
    %17 = vector.broadcast %7 : vector<1x256xf32> to vector<12x256xf32>
    %18 = arith.mulf %16, %17 : vector<12x256xf32>
    %c3 = arith.constant 3 : index
    %c0_15 = arith.constant 0 : index
    %c0_16 = arith.constant 0 : index
    %19 = vector.load %arg2[%c3, %c0_15, %c0_16] : memref<9x12x1xf32, #tpu.memory_space<vmem>>, vector<1x12x1xf32>
    %20 = vector.shape_cast %19 : vector<1x12x1xf32> to vector<12x1xf32>
    %21 = vector.broadcast %20 : vector<12x1xf32> to vector<12x256xf32>
    %22 = arith.mulf %21, %18 : vector<12x256xf32>
    %23 = arith.addf %15, %22 : vector<12x256xf32>
    %c0_17 = arith.constant 0 : index
    %c32 = arith.constant 32 : index
    %24 = vector.load %arg5[%c0_17, %c32] : memref<12x290xf32, #tpu.memory_space<vmem>>, vector<12x256xf32>
    %25 = vector.broadcast %7 : vector<1x256xf32> to vector<12x256xf32>
    %26 = arith.mulf %24, %25 : vector<12x256xf32>
    %c6 = arith.constant 6 : index
    %c0_18 = arith.constant 0 : index
    %c0_19 = arith.constant 0 : index
    %27 = vector.load %arg2[%c6, %c0_18, %c0_19] : memref<9x12x1xf32, #tpu.memory_space<vmem>>, vector<1x12x1xf32>
    %28 = vector.shape_cast %27 : vector<1x12x1xf32> to vector<12x1xf32>
    %29 = vector.broadcast %28 : vector<12x1xf32> to vector<12x256xf32>
    %30 = arith.mulf %29, %26 : vector<12x256xf32>
    %31 = arith.addf %23, %30 : vector<12x256xf32>
    %c0_20 = arith.constant 0 : index
    %c1 = arith.constant 1 : index
    %32 = vector.load %arg5[%c0_20, %c1] : memref<12x290xf32, #tpu.memory_space<vmem>>, vector<12x256xf32>
    %c1_21 = arith.constant 1 : index
    %c0_22 = arith.constant 0 : index
    %c0_23 = arith.constant 0 : index
    %33 = vector.load %arg2[%c1_21, %c0_22, %c0_23] : memref<9x12x1xf32, #tpu.memory_space<vmem>>, vector<1x12x1xf32>
    %34 = vector.shape_cast %33 : vector<1x12x1xf32> to vector<12x1xf32>
    %35 = vector.broadcast %34 : vector<12x1xf32> to vector<12x256xf32>
    %36 = arith.mulf %35, %32 : vector<12x256xf32>
    %37 = arith.addf %31, %36 : vector<12x256xf32>
    %c0_24 = arith.constant 0 : index
    %c17_25 = arith.constant 17 : index
    %38 = vector.load %arg5[%c0_24, %c17_25] : memref<12x290xf32, #tpu.memory_space<vmem>>, vector<12x256xf32>
    %c4 = arith.constant 4 : index
    %c0_26 = arith.constant 0 : index
    %c0_27 = arith.constant 0 : index
    %39 = vector.load %arg2[%c4, %c0_26, %c0_27] : memref<9x12x1xf32, #tpu.memory_space<vmem>>, vector<1x12x1xf32>
    %40 = vector.shape_cast %39 : vector<1x12x1xf32> to vector<12x1xf32>
    %41 = vector.broadcast %40 : vector<12x1xf32> to vector<12x256xf32>
    %42 = arith.mulf %41, %38 : vector<12x256xf32>
    %43 = arith.addf %37, %42 : vector<12x256xf32>
    %c0_28 = arith.constant 0 : index
    %c33 = arith.constant 33 : index
    %44 = vector.load %arg5[%c0_28, %c33] : memref<12x290xf32, #tpu.memory_space<vmem>>, vector<12x256xf32>
    %c7 = arith.constant 7 : index
    %c0_29 = arith.constant 0 : index
    %c0_30 = arith.constant 0 : index
    %45 = vector.load %arg2[%c7, %c0_29, %c0_30] : memref<9x12x1xf32, #tpu.memory_space<vmem>>, vector<1x12x1xf32>
    %46 = vector.shape_cast %45 : vector<1x12x1xf32> to vector<12x1xf32>
    %47 = vector.broadcast %46 : vector<12x1xf32> to vector<12x256xf32>
    %48 = arith.mulf %47, %44 : vector<12x256xf32>
    %49 = arith.addf %43, %48 : vector<12x256xf32>
    %c1_31 = arith.constant 1 : index
    %c0_32 = arith.constant 0 : index
    %50 = vector.load %arg3[%c1_31, %c0_32] : memref<2x256xf32, #tpu.memory_space<vmem>>, vector<1x256xf32>
    %c0_33 = arith.constant 0 : index
    %c2 = arith.constant 2 : index
    %51 = vector.load %arg5[%c0_33, %c2] : memref<12x290xf32, #tpu.memory_space<vmem>>, vector<12x256xf32>
    %52 = vector.broadcast %50 : vector<1x256xf32> to vector<12x256xf32>
    %53 = arith.mulf %51, %52 : vector<12x256xf32>
    %c2_34 = arith.constant 2 : index
    %c0_35 = arith.constant 0 : index
    %c0_36 = arith.constant 0 : index
    %54 = vector.load %arg2[%c2_34, %c0_35, %c0_36] : memref<9x12x1xf32, #tpu.memory_space<vmem>>, vector<1x12x1xf32>
    %55 = vector.shape_cast %54 : vector<1x12x1xf32> to vector<12x1xf32>
    %56 = vector.broadcast %55 : vector<12x1xf32> to vector<12x256xf32>
    %57 = arith.mulf %56, %53 : vector<12x256xf32>
    %58 = arith.addf %49, %57 : vector<12x256xf32>
    %c0_37 = arith.constant 0 : index
    %c18 = arith.constant 18 : index
    %59 = vector.load %arg5[%c0_37, %c18] : memref<12x290xf32, #tpu.memory_space<vmem>>, vector<12x256xf32>
    %60 = vector.broadcast %50 : vector<1x256xf32> to vector<12x256xf32>
    %61 = arith.mulf %59, %60 : vector<12x256xf32>
    %c5 = arith.constant 5 : index
    %c0_38 = arith.constant 0 : index
    %c0_39 = arith.constant 0 : index
    %62 = vector.load %arg2[%c5, %c0_38, %c0_39] : memref<9x12x1xf32, #tpu.memory_space<vmem>>, vector<1x12x1xf32>
    %63 = vector.shape_cast %62 : vector<1x12x1xf32> to vector<12x1xf32>
    %64 = vector.broadcast %63 : vector<12x1xf32> to vector<12x256xf32>
    %65 = arith.mulf %64, %61 : vector<12x256xf32>
    %66 = arith.addf %58, %65 : vector<12x256xf32>
    %c0_40 = arith.constant 0 : index
    %c34 = arith.constant 34 : index
    %67 = vector.load %arg5[%c0_40, %c34] : memref<12x290xf32, #tpu.memory_space<vmem>>, vector<12x256xf32>
    %68 = vector.broadcast %50 : vector<1x256xf32> to vector<12x256xf32>
    %69 = arith.mulf %67, %68 : vector<12x256xf32>
    %c8 = arith.constant 8 : index
    %c0_41 = arith.constant 0 : index
    %c0_42 = arith.constant 0 : index
    %70 = vector.load %arg2[%c8, %c0_41, %c0_42] : memref<9x12x1xf32, #tpu.memory_space<vmem>>, vector<1x12x1xf32>
    %71 = vector.shape_cast %70 : vector<1x12x1xf32> to vector<12x1xf32>
    %72 = vector.broadcast %71 : vector<12x1xf32> to vector<12x256xf32>
    %73 = arith.mulf %72, %69 : vector<12x256xf32>
    %74 = arith.addf %66, %73 : vector<12x256xf32>
    %c0_43 = arith.constant 0 : index
    %c0_44 = arith.constant 0 : index
    %c0_45 = arith.constant 0 : index
    %75 = vector.load %arg4[%c0_43, %c0_44, %c0_45] : memref<1x12x256xf32, #tpu.memory_space<vmem>>, vector<1x12x256xf32>
    %76 = vector.shape_cast %75 : vector<1x12x256xf32> to vector<12x256xf32>
    %77 = vector.shape_cast %74 : vector<12x256xf32> to vector<1x12x256xf32>
    tpu.vector_store %arg4[%c0_43, %c0_44, %c0_45], %77 {strides = array<i32>} : memref<1x12x256xf32, #tpu.memory_space<vmem>>, vector<1x12x256xf32>,
    return
  }
  func.func @transform_0(%arg0: i32) -> (i32, i32, i32) {
    %c0_i32 = arith.constant 0 : i32
    %c0_i32_0 = arith.constant 0 : i32
    %c0_i32_1 = arith.constant 0 : i32
    return %arg0, %c0_i32, %c0_i32_0 : i32, i32, i32
  }
  func.func @transform_1(%arg0: i32) -> (i32, i32, i32) {
    %c0_i32 = arith.constant 0 : i32
    %c0_i32_0 = arith.constant 0 : i32
    %c0_i32_1 = arith.constant 0 : i32
    %c0_i32_2 = arith.constant 0 : i32
    return %c0_i32, %c0_i32_0, %c0_i32_1 : i32, i32, i32
  }
  func.func @transform_2(%arg0: i32) -> (i32, i32) {
    %c0_i32 = arith.constant 0 : i32
    %c0_i32_0 = arith.constant 0 : i32
    %c0_i32_1 = arith.constant 0 : i32
    return %c0_i32, %c0_i32_0 : i32, i32
  }
  func.func @transform_3(%arg0: i32) -> (i32, i32, i32) {
    %c0_i32 = arith.constant 0 : i32
    %c0_i32_0 = arith.constant 0 : i32
    %c0_i32_1 = arith.constant 0 : i32
    return %arg0, %c0_i32, %c0_i32_0 : i32, i32, i32
  }
}

</mosaic_0001>

<llo_original>
// kernel: tpu_custom_call.1
$region0: #{tpu_custom_call.1}
  #allocation0 [shape = 'u32[]', space=smem, size = 0x4, offset = 0x4, fixed_abs, tag = 'smem constant byte address 0x4 - core index']
  #allocation1 [shape = 'u32[72,128]{1,0:T(1,128)}', space=vmem, size = 0x9000, scoped, tag = 'internal scratch']
  #allocation2 [shape = 'f32[12,290]{1,0:T(8,128)}', space=vmem, size = 0x6000, scoped, tag = 'scratch operand']
  %s0 = inlined_call_operand.vmem [shape: f32[2,12,256], index: 0, kind: input, shape index: {}]
  %s1 = inlined_call_operand.vmem [shape: f32[9,12,1], index: 1, kind: input, shape index: {}]
  %s2 = inlined_call_operand.vmem [shape: f32[2,256], index: 2, kind: input, shape index: {}]
  %s3 = inlined_call_operand.vmem [shape: f32[2,12,256], index: 3, kind: output, shape index: {}]
  %s4 = sld [smem:[#allocation0]]
  $region45: #{tpu_custom_call.1} parent=0
    _
  %s6 = ssub.s32 1, %s4
  %s7 = scalar_select 0, %s6, %s4
  loop: start=0, step=1, limit=4
  $region2: #{tpu_custom_call.1} parent=0 // loop_pre_header
    _
  $region3: #{tpu_custom_call.1} parent=0 // loop_header
    %s9 = sphi 0, %s13
    %p10 = scmp.ge.s32.totalorder %s9, 4
    %s19 = sphi 0, %s21
    %s22 = sphi 0, %s19
    %s23 = sphi 0, %s22
    %s39 = sphi 0, %s23
    %s43 = sphi 0, %s43
    %s45 = sphi 0, %s43
    %s46 = sphi 0, %s45
    %s60 = sphi 0, %s46
    %s64 = sphi 0, %s64
    %s66 = sphi 0, %s64
    %s67 = sphi 0, %s66
    %s81 = sphi 0, %s67
    %s87 = sphi 0, %s89
    %s90 = sphi 0, %s87
    %s91 = sphi 0, %s90
    %s107 = sphi 0, %s91
  $region4: #{tpu_custom_call.1} parent=0 // loop_header_branch
    %12 = sbr.rel (%p10) target = $region8
  $region5: #{tpu_custom_call.1} parent=0 // loop_body
    %s14 = ssub.s32 %s9, 1
    %s15 = ssub.s32 %s9, 2
    %s16 = sadd.s32 %s9, 1
    %s17 = ssub.s32 %s9, %s16
    %p18 = scmp.eq.s32.totalorder %s17, 0
    %s20 = sadd.s32 %s19, 1
    %s21 = scalar_select %p18, %s19, %s20
    %p24 = pneg %p18
    %p25 = scmp.eq.s32.totalorder %s9, 1
    %p26 = por %p24, %p25
    %p27 = scmp.ne.s32.totalorder %s19, %s22
    %p28 = scmp.eq.s32.totalorder %s9, 0
    %p29 = por %p27, %p28
    %p30 = scmp.ne.s32.totalorder %s19, %s22
    %p31 = scmp.eq.s32.totalorder %s14, 1
    %p32 = por %p30, %p31
    %p33 = scmp.ne.s32.totalorder %s22, %s23
    %p34 = scmp.eq.s32.totalorder %s14, 0
    %p35 = por %p33, %p34
    %p36 = scmp.ne.s32.totalorder %s22, %s23
    %p37 = scmp.eq.s32.totalorder %s15, 1
    %p38 = por %p36, %p37
    %p40 = scmp.ne.s32.totalorder %s23, %s39
    %p41 = scmp.eq.s32.totalorder %s15, 0
    %p42 = por %p40, %p41
    %s44 = sadd.s32 %s43, 1
    %p47 = scmp.eq.s32.totalorder %s9, 1
    %p48 = scmp.ne.s32.totalorder %s43, %s45
    %p49 = scmp.eq.s32.totalorder %s9, 0
    %p50 = por %p48, %p49
    %p51 = scmp.ne.s32.totalorder %s43, %s45
    %p52 = scmp.eq.s32.totalorder %s14, 1
    %p53 = por %p51, %p52
    %p54 = scmp.ne.s32.totalorder %s45, %s46
    %p55 = scmp.eq.s32.totalorder %s14, 0
    %p56 = por %p54, %p55
    %p57 = scmp.ne.s32.totalorder %s45, %s46
    %p58 = scmp.eq.s32.totalorder %s15, 1
    %p59 = por %p57, %p58
    %p61 = scmp.ne.s32.totalorder %s46, %s60
    %p62 = scmp.eq.s32.totalorder %s15, 0
    %p63 = por %p61, %p62
    %s65 = sadd.s32 %s64, 1
    %p68 = scmp.eq.s32.totalorder %s9, 1
    %p69 = scmp.ne.s32.totalorder %s64, %s66
    %p70 = scmp.eq.s32.totalorder %s9, 0
    %p71 = por %p69, %p70
    %p72 = scmp.ne.s32.totalorder %s64, %s66
    %p73 = scmp.eq.s32.totalorder %s14, 1
    %p74 = por %p72, %p73
    %p75 = scmp.ne.s32.totalorder %s66, %s67
    %p76 = scmp.eq.s32.totalorder %s14, 0
    %p77 = por %p75, %p76
    %p78 = scmp.ne.s32.totalorder %s66, %s67
    %p79 = scmp.eq.s32.totalorder %s15, 1
    %p80 = por %p78, %p79
    %p82 = scmp.ne.s32.totalorder %s67, %s81
    %p83 = scmp.eq.s32.totalorder %s15, 0
    %p84 = por %p82, %p83
    %s85 = ssub.s32 %s9, %s16
    %p86 = scmp.eq.s32.totalorder %s85, 0
    %s88 = sadd.s32 %s87, 1
    %s89 = scalar_select %p86, %s87, %s88
    %p92 = pneg %p86
    %p93 = scmp.eq.s32.totalorder %s9, 1
    %p94 = por %p92, %p93
    %p95 = scmp.ne.s32.totalorder %s87, %s90
    %p96 = scmp.eq.s32.totalorder %s9, 0
    %p97 = por %p95, %p96
    %p98 = scmp.ne.s32.totalorder %s87, %s90
    %p99 = scmp.eq.s32.totalorder %s14, 1
    %p100 = por %p98, %p99
    %p101 = scmp.ne.s32.totalorder %s90, %s91
    %p102 = scmp.eq.s32.totalorder %s14, 0
    %p103 = por %p101, %p102
    %p104 = scmp.ne.s32.totalorder %s90, %s91
    %p105 = scmp.eq.s32.totalorder %s15, 1
    %p106 = por %p104, %p105
    %p108 = scmp.ne.s32.totalorder %s91, %s107
    %p109 = scmp.eq.s32.totalorder %s15, 0
    %p110 = por %p108, %p109
    %p111 = scmp.le.s32.totalorder 1, %s9
    %p112 = scmp.lt.s32.totalorder %s9, 3
    %p113 = pnand %p111, %p112
    %p114 = pneg %p113
    // Predicated region
    $region9: #{tpu_custom_call.1} parent=5 // pred_check
      _
    $region10: #{tpu_custom_call.1} parent=5 // pred_check_branch
      %116 = sbr.rel (%p113) target = $region12
    $region11: #{tpu_custom_call.1} parent=5 // pred_region
      %s117 = ssub.s32 %s9, 1
      // Predicated region
      $region13: #{tpu_custom_call.1} parent=11 // pred_check
        %p118 = pneg %p56
      $region14: #{tpu_custom_call.1} parent=11 // pred_check_branch
        %120 = sbr.rel (%p118) target = $region16
      $region15: #{tpu_custom_call.1} parent=11 // pred_region
        _
      $region16: #{tpu_custom_call.1} parent=11 // pred_fallthru
        _
      // Predicated region
      $region17: #{tpu_custom_call.1} parent=11 // pred_check
        %p121 = pneg %p77
      $region18: #{tpu_custom_call.1} parent=11 // pred_check_branch
        %123 = sbr.rel (%p121) target = $region20
      $region19: #{tpu_custom_call.1} parent=11 // pred_region
        _
      $region20: #{tpu_custom_call.1} parent=11 // pred_fallthru
        _
    $region12: #{tpu_custom_call.1} parent=5 // pred_fallthru
      _
    %p124 = scmp.lt.s32.totalorder %s9, 2
    // Predicated region
    $region21: #{tpu_custom_call.1} parent=5 // pred_check
      %p125 = pneg %p124
    $region22: #{tpu_custom_call.1} parent=5 // pred_check_branch
      %127 = sbr.rel (%p125) target = $region24
    $region23: #{tpu_custom_call.1} parent=5 // pred_region
      // Predicated region
      $region25: #{tpu_custom_call.1} parent=23 // pred_check
        %p128 = pneg %p29
      $region26: #{tpu_custom_call.1} parent=23 // pred_check_branch
        %130 = sbr.rel (%p128) target = $region28
      $region27: #{tpu_custom_call.1} parent=23 // pred_region
        %p131 = scmp.lt.s32.totalorder %s9, 1
        %s132 = scalar_select %p131, %s9, 1
        %s133 = smul.addr %s132, 4
        %s134 = smul.addr %s133, 8
        %s135 = scalar_lea.vmem %s0, %s134
      $region28: #{tpu_custom_call.1} parent=23 // pred_fallthru
        _
    $region24: #{tpu_custom_call.1} parent=5 // pred_fallthru
      _
    %p136 = scmp.le.s32.totalorder 1, %s9
    %p137 = scmp.lt.s32.totalorder %s9, 3
    %p138 = pnand %p136, %p137
    %p139 = pneg %p138
    // Predicated region
    $region29: #{tpu_custom_call.1} parent=5 // pred_check
      _
    $region30: #{tpu_custom_call.1} parent=5 // pred_check_branch
      %141 = sbr.rel (%p138) target = $region32
    $region31: #{tpu_custom_call.1} parent=5 // pred_region
      %s142 = ssub.s32 %s9, 1
      %p143 = scmp.lt.s32.totalorder %s14, 1
      %s144 = scalar_select %p143, %s14, 1
      %s145 = smul.addr %s144, 4
      %s146 = smul.addr %s145, 8
      %s147 = scalar_lea.vmem %s0, %s146
      %p148 = pneg %p35
      %p149 = pneg %p32
      %p150 = pneg %p56
      %p151 = pneg %p53
      %p152 = pneg %p77
      %p153 = pneg %p74
      %p154 = pneg %p103
      %p155 = pneg %p100
      %p156 = scmp.lt.s32.totalorder %s14, 1
      %s157 = scalar_select %p156, %s14, 1
      %s158 = smul.addr %s157, 4
      %s159 = smul.addr %s158, 8
      %s160 = scalar_lea.vmem %s3, %s159
      %p161 = scmp.lt.s32.totalorder %s14, 1
      %s162 = scalar_select %p161, %s14, 1
      %s163 = smul.addr %s162, 4
      %s164 = smul.addr %s163, 8
      %s165 = scalar_lea.vmem %s0, %s164
      %p166 = scmp.lt.s32.totalorder %s14, 1
      %s167 = scalar_select %p166, %s14, 1
      %s168 = smul.addr %s167, 4
      %s169 = smul.addr %s168, 8
      %s170 = scalar_lea.vmem %s3, %s169
      %vm171 = vcmask 138240
      %172 = vst.msk [vmem:[#allocation2] sm:$0xff] %vm171, 0.0
      %vm173 = vcmask 134144
      %174 = vst.msk [vmem:[#allocation2 + $0x18] sm:$0xf] %vm173, 0.0
      %vm175 = vcmask 277640
      %176 = vst.msk [vmem:[#allocation2 + $0x10] sm:$0xff] %vm175, 0.0
      %vm177 = vcmask 273544
      %178 = vst.msk [vmem:[#allocation2 + $0x28] sm:$0xf] %vm177, 0.0
      %v179 = vld [vmem:[%s165] sm:$0xff]
      %v180 = vld [vmem:[%s165 + $0x8] sm:$0xff]
      %v181 = vld [vmem:[%s165 + $0x10] sm:$0xf]
      %v182 = vld [vmem:[%s165 + $0x18] sm:$0xf]
      %187 = vrot.lane.b32.xlu0 %v179, 17
      %v188 = vpop.permute.xlu0 %187
      %189 = vrot.lane.b32.xlu0 %v180, 17
      %v190 = vpop.permute.xlu0 %189
      %191 = vrot.lane.b32.xlu0 %v181, 17
      %v192 = vpop.permute.xlu0 %191
      %193 = vrot.lane.b32.xlu0 %v182, 17
      %v194 = vpop.permute.xlu0 %193
      %v195 = vsel %vm171, %v188, %v190
      %v196 = vsel %vm171, %v192, %v194
      %vm203 = vcmask 1047688
      %204 = vst.msk [vmem:[#allocation2] sm:$0xff] %vm203, %v188
      %205 = vst [vmem:[#allocation2 + $0x8] sm:$0xff] %v195
      %206 = vst.msk [vmem:[#allocation2 + $0x10] sm:$0xff] %vm171, %v190
      %vm207 = vcmask 1043592
      %208 = vst.msk [vmem:[#allocation2 + $0x18] sm:$0xf] %vm207, %v192
      %209 = vst [vmem:[#allocation2 + $0x20] sm:$0xf] %v196
      %210 = vst.msk [vmem:[#allocation2 + $0x28] sm:$0xf] %vm173, %v194
      %v211 = vld [vmem:[%s2] ss:$2 sm:$0x3]
      %v212 = vld [vmem:[#allocation2] sm:$0xff]
      %v213 = vld [vmem:[#allocation2 + $0x8] sm:$0xff]
      %v214 = vld [vmem:[#allocation2 + $0x18] sm:$0xf]
      %v215 = vld [vmem:[#allocation2 + $0x20] sm:$0xf]
      %v217 = vperm.slane %v211, 0
      %v218 = vperm.slane %v211, 1
      %v221 = vmul.f32 %v212, %v217
      %v222 = vmul.f32 %v213, %v218
      %v223 = vmul.f32 %v214, %v217
      %v224 = vmul.f32 %v215, %v218
      %v225 = vld [vmem:[%s1] sm:$0xff]
      %v226 = vld [vmem:[%s1 + $0x8] sm:$0xf]
      %228 = vset.pattern.permute.xlu0 0
      %229 = vperm.xlu0 %228, %v225
      %v230 = vpop.permute.xlu0 %229
      %233 = vset.pattern.permute.xlu0 0
      %234 = vperm.xlu0 %233, %v226
      %v235 = vpop.permute.xlu0 %234
      %v237 = vmul.f32 %v230, %v221
      %v238 = vmul.f32 %v230, %v222
      %v239 = vmul.f32 %v235, %v223
      %v240 = vmul.f32 %v235, %v224
      %v241 = vadd.f32 %v237, 0.0
      %v242 = vadd.f32 %v238, 0.0
      %v243 = vadd.f32 %v239, 0.0
      %v244 = vadd.f32 %v240, 0.0
      %v245 = vld [vmem:[#allocation2] sm:$0xff]
      %v246 = vld [vmem:[#allocation2 + $0x8] sm:$0xff]
      %v247 = vld [vmem:[#allocation2 + $0x10] sm:$0xff]
      %v248 = vld [vmem:[#allocation2 + $0x18] sm:$0xf]
      %v249 = vld [vmem:[#allocation2 + $0x20] sm:$0xf]
      %v250 = vld [vmem:[#allocation2 + $0x28] sm:$0xf]
      %251 = vrot.lane.b32.xlu0 %v217, 16
      %v252 = vpop.permute.xlu0 %251
      %253 = vrot.lane.b32.xlu0 %v218, 16
      %v254 = vpop.permute.xlu0 %253
      %vm255 = vcmask 130048
      %v256 = vsel %vm255, %v252, %v254
      %v260 = vmul.f32 %v245, %v252
      %v261 = vmul.f32 %v246, %v256
      %v262 = vmul.f32 %v247, %v254
      %v263 = vmul.f32 %v248, %v252
      %v264 = vmul.f32 %v249, %v256
      %v265 = vmul.f32 %v250, %v254
      %s266 = scalar_lea.vmem %s1, 48
      %v267 = vld [vmem:[%s266] sm:$0xff]
      %v268 = vld [vmem:[%s266 + $0x8] sm:$0xf]
      %270 = vset.pattern.permute.xlu0 0
      %271 = vperm.xlu0 %270, %v267
      %v272 = vpop.permute.xlu0 %271
      %275 = vset.pattern.permute.xlu0 0
      %276 = vperm.xlu0 %275, %v268
      %v277 = vpop.permute.xlu0 %276
      %v279 = vmul.f32 %v272, %v260
      %v280 = vmul.f32 %v272, %v261
      %v281 = vmul.f32 %v272, %v262
      %v282 = vmul.f32 %v277, %v263
      %v283 = vmul.f32 %v277, %v264
      %v284 = vmul.f32 %v277, %v265
      %291 = vrot.lane.b32.xlu0 %v279, 112
      %v292 = vpop.permute.xlu0 %291
      %293 = vrot.lane.b32.xlu0 %v280, 112
      %v294 = vpop.permute.xlu0 %293
      %295 = vrot.lane.b32.xlu0 %v281, 112
      %v296 = vpop.permute.xlu0 %295
      %297 = vrot.lane.b32.xlu0 %v282, 112
      %v298 = vpop.permute.xlu0 %297
      %299 = vrot.lane.b32.xlu0 %v283, 112
      %v300 = vpop.permute.xlu0 %299
      %301 = vrot.lane.b32.xlu0 %v284, 112
      %v302 = vpop.permute.xlu0 %301
      %vm303 = vcmask 916480
      %v304 = vsel %vm303, %v292, %v294
      %v305 = vsel %vm303, %v294, %v296
      %v306 = vsel %vm303, %v298, %v300
      %v307 = vsel %vm303, %v300, %v302
      %v312 = vadd.f32 %v241, %v304
      %v313 = vadd.f32 %v242, %v305
      %v314 = vadd.f32 %v243, %v306
      %v315 = vadd.f32 %v244, %v307
      %316 = vrot.lane.b32.xlu0 %v217, 32
      %v317 = vpop.permute.xlu0 %316
      %318 = vrot.lane.b32.xlu0 %v218, 32
      %v319 = vpop.permute.xlu0 %318
      %vm320 = vcmask 261120
      %v321 = vsel %vm320, %v317, %v319
      %v325 = vmul.f32 %v245, %v317
      %v326 = vmul.f32 %v246, %v321
      %v327 = vmul.f32 %v247, %v319
      %v328 = vmul.f32 %v248, %v317
      %v329 = vmul.f32 %v249, %v321
      %v330 = vmul.f32 %v250, %v319
      %s331 = scalar_lea.vmem %s1, 96
      %v332 = vld [vmem:[%s331] sm:$0xff]
      %v333 = vld [vmem:[%s331 + $0x8] sm:$0xf]
      %335 = vset.pattern.permute.xlu0 0
      %336 = vperm.xlu0 %335, %v332
      %v337 = vpop.permute.xlu0 %336
      %340 = vset.pattern.permute.xlu0 0
      %341 = vperm.xlu0 %340, %v333
      %v342 = vpop.permute.xlu0 %341
      %v344 = vmul.f32 %v337, %v325
      %v345 = vmul.f32 %v337, %v326
      %v346 = vmul.f32 %v337, %v327
      %v347 = vmul.f32 %v342, %v328
      %v348 = vmul.f32 %v342, %v329
      %v349 = vmul.f32 %v342, %v330
      %356 = vrot.lane.b32.xlu0 %v344, 96
      %v357 = vpop.permute.xlu0 %356
      %358 = vrot.lane.b32.xlu0 %v345, 96
      %v359 = vpop.permute.xlu0 %358
      %360 = vrot.lane.b32.xlu0 %v346, 96
      %v361 = vpop.permute.xlu0 %360
      %362 = vrot.lane.b32.xlu0 %v347, 96
      %v363 = vpop.permute.xlu0 %362
      %364 = vrot.lane.b32.xlu0 %v348, 96
      %v365 = vpop.permute.xlu0 %364
      %366 = vrot.lane.b32.xlu0 %v349, 96
      %v367 = vpop.permute.xlu0 %366
      %vm368 = vcmask 785408
      %v369 = vsel %vm368, %v357, %v359
      %v370 = vsel %vm368, %v359, %v361
      %v371 = vsel %vm368, %v363, %v365
      %v372 = vsel %vm368, %v365, %v367
      %v377 = vadd.f32 %v312, %v369
      %v378 = vadd.f32 %v313, %v370
      %v379 = vadd.f32 %v314, %v371
      %v380 = vadd.f32 %v315, %v372
      %s381 = scalar_lea.vmem %s1, 16
      %v382 = vld [vmem:[%s381] sm:$0xff]
      %v383 = vld [vmem:[%s381 + $0x8] sm:$0xf]
      %385 = vset.pattern.permute.xlu0 0
      %386 = vperm.xlu0 %385, %v382
      %v387 = vpop.permute.xlu0 %386
      %390 = vset.pattern.permute.xlu0 0
      %391 = vperm.xlu0 %390, %v383
      %v392 = vpop.permute.xlu0 %391
      %v394 = vmul.f32 %v387, %v245
      %v395 = vmul.f32 %v387, %v246
      %v396 = vmul.f32 %v387, %v247
      %v397 = vmul.f32 %v392, %v248
      %v398 = vmul.f32 %v392, %v249
      %v399 = vmul.f32 %v392, %v250
      %406 = vrot.lane.b32.xlu0 %v394, 127
      %v407 = vpop.permute.xlu0 %406
      %408 = vrot.lane.b32.xlu0 %v395, 127
      %v409 = vpop.permute.xlu0 %408
      %410 = vrot.lane.b32.xlu0 %v396, 127
      %v411 = vpop.permute.xlu0 %410
      %412 = vrot.lane.b32.xlu0 %v397, 127
      %v413 = vpop.permute.xlu0 %412
      %414 = vrot.lane.b32.xlu0 %v398, 127
      %v415 = vpop.permute.xlu0 %414
      %416 = vrot.lane.b32.xlu0 %v399, 127
      %v417 = vpop.permute.xlu0 %416
      %vm418 = vcmask 1039360
      %v419 = vsel %vm418, %v407, %v409
      %v420 = vsel %vm418, %v409, %v411
      %v421 = vsel %vm418, %v413, %v415
      %v422 = vsel %vm418, %v415, %v417
      %v427 = vadd.f32 %v377, %v419
      %v428 = vadd.f32 %v378, %v420
      %v429 = vadd.f32 %v379, %v421
      %v430 = vadd.f32 %v380, %v422
      %s431 = scalar_lea.vmem %s1, 64
      %v432 = vld [vmem:[%s431] sm:$0xff]
      %v433 = vld [vmem:[%s431 + $0x8] sm:$0xf]
      %435 = vset.pattern.permute.xlu0 0
      %436 = vperm.xlu0 %435, %v432
      %v437 = vpop.permute.xlu0 %436
      %440 = vset.pattern.permute.xlu0 0
      %441 = vperm.xlu0 %440, %v433
      %v442 = vpop.permute.xlu0 %441
      %v444 = vmul.f32 %v437, %v245
      %v445 = vmul.f32 %v437, %v246
      %v446 = vmul.f32 %v437, %v247
      %v447 = vmul.f32 %v442, %v248
      %v448 = vmul.f32 %v442, %v249
      %v449 = vmul.f32 %v442, %v250
      %456 = vrot.lane.b32.xlu0 %v444, 111
      %v457 = vpop.permute.xlu0 %456
      %458 = vrot.lane.b32.xlu0 %v445, 111
      %v459 = vpop.permute.xlu0 %458
      %460 = vrot.lane.b32.xlu0 %v446, 111
      %v461 = vpop.permute.xlu0 %460
      %462 = vrot.lane.b32.xlu0 %v447, 111
      %v463 = vpop.permute.xlu0 %462
      %464 = vrot.lane.b32.xlu0 %v448, 111
      %v465 = vpop.permute.xlu0 %464
      %466 = vrot.lane.b32.xlu0 %v449, 111
      %v467 = vpop.permute.xlu0 %466
      %vm468 = vcmask 908288
      %v469 = vsel %vm468, %v457, %v459
      %v470 = vsel %vm468, %v459, %v461
      %v471 = vsel %vm468, %v463, %v465
      %v472 = vsel %vm468, %v465, %v467
      %v477 = vadd.f32 %v427, %v469
      %v478 = vadd.f32 %v428, %v470
      %v479 = vadd.f32 %v429, %v471
      %v480 = vadd.f32 %v430, %v472
      %s481 = scalar_lea.vmem %s1, 112
      %v482 = vld [vmem:[%s481] sm:$0xff]
      %v483 = vld [vmem:[%s481 + $0x8] sm:$0xf]
      %485 = vset.pattern.permute.xlu0 0
      %486 = vperm.xlu0 %485, %v482
      %v487 = vpop.permute.xlu0 %486
      %490 = vset.pattern.permute.xlu0 0
      %491 = vperm.xlu0 %490, %v483
      %v492 = vpop.permute.xlu0 %491
      %v494 = vmul.f32 %v487, %v245
      %v495 = vmul.f32 %v487, %v246
      %v496 = vmul.f32 %v487, %v247
      %v497 = vmul.f32 %v492, %v248
      %v498 = vmul.f32 %v492, %v249
      %v499 = vmul.f32 %v492, %v250
      %506 = vrot.lane.b32.xlu0 %v494, 95
      %v507 = vpop.permute.xlu0 %506
      %508 = vrot.lane.b32.xlu0 %v495, 95
      %v509 = vpop.permute.xlu0 %508
      %510 = vrot.lane.b32.xlu0 %v496, 95
      %v511 = vpop.permute.xlu0 %510
      %512 = vrot.lane.b32.xlu0 %v497, 95
      %v513 = vpop.permute.xlu0 %512
      %514 = vrot.lane.b32.xlu0 %v498, 95
      %v515 = vpop.permute.xlu0 %514
      %516 = vrot.lane.b32.xlu0 %v499, 95
      %v517 = vpop.permute.xlu0 %516
      %vm518 = vcmask 777216
      %v519 = vsel %vm518, %v507, %v509
      %v520 = vsel %vm518, %v509, %v511
      %v521 = vsel %vm518, %v513, %v515
      %v522 = vsel %vm518, %v515, %v517
      %v527 = vadd.f32 %v477, %v519
      %v528 = vadd.f32 %v478, %v520
      %v529 = vadd.f32 %v479, %v521
      %v530 = vadd.f32 %v480, %v522
      %s531 = scalar_lea.vmem %s2, 1
      %v532 = vld [vmem:[%s531] ss:$2 sm:$0x3]
      %v534 = vperm.slane %v532, 0
      %v535 = vperm.slane %v532, 1
      %536 = vrot.lane.b32.xlu0 %v534, 2
      %v537 = vpop.permute.xlu0 %536
      %538 = vrot.lane.b32.xlu0 %v535, 2
      %v539 = vpop.permute.xlu0 %538
      %vm540 = vcmask 15360
      %v541 = vsel %vm540, %v537, %v539
      %v545 = vmul.f32 %v245, %v537
      %v546 = vmul.f32 %v246, %v541
      %v547 = vmul.f32 %v247, %v539
      %v548 = vmul.f32 %v248, %v537
      %v549 = vmul.f32 %v249, %v541
      %v550 = vmul.f32 %v250, %v539
      %s551 = scalar_lea.vmem %s1, 32
      %v552 = vld [vmem:[%s551] sm:$0xff]
      %v553 = vld [vmem:[%s551 + $0x8] sm:$0xf]
      %555 = vset.pattern.permute.xlu0 0
      %556 = vperm.xlu0 %555, %v552
      %v557 = vpop.permute.xlu0 %556
      %560 = vset.pattern.permute.xlu0 0
      %561 = vperm.xlu0 %560, %v553
      %v562 = vpop.permute.xlu0 %561
      %v564 = vmul.f32 %v557, %v545
      %v565 = vmul.f32 %v557, %v546
      %v566 = vmul.f32 %v557, %v547
      %v567 = vmul.f32 %v562, %v548
      %v568 = vmul.f32 %v562, %v549
      %v569 = vmul.f32 %v562, %v550
      %576 = vrot.lane.b32.xlu0 %v564, 126
      %v577 = vpop.permute.xlu0 %576
      %578 = vrot.lane.b32.xlu0 %v565, 126
      %v579 = vpop.permute.xlu0 %578
      %580 = vrot.lane.b32.xlu0 %v566, 126
      %v581 = vpop.permute.xlu0 %580
      %582 = vrot.lane.b32.xlu0 %v567, 126
      %v583 = vpop.permute.xlu0 %582
      %584 = vrot.lane.b32.xlu0 %v568, 126
      %v585 = vpop.permute.xlu0 %584
      %586 = vrot.lane.b32.xlu0 %v569, 126
      %v587 = vpop.permute.xlu0 %586
      %vm588 = vcmask 1031168
      %v589 = vsel %vm588, %v577, %v579
      %v590 = vsel %vm588, %v579, %v581
      %v591 = vsel %vm588, %v583, %v585
      %v592 = vsel %vm588, %v585, %v587
      %v597 = vadd.f32 %v527, %v589
      %v598 = vadd.f32 %v528, %v590
      %v599 = vadd.f32 %v529, %v591
      %v600 = vadd.f32 %v530, %v592
      %601 = vrot.lane.b32.xlu0 %v534, 18
      %v602 = vpop.permute.xlu0 %601
      %603 = vrot.lane.b32.xlu0 %v535, 18
      %v604 = vpop.permute.xlu0 %603
      %vm605 = vcmask 146432
      %v606 = vsel %vm605, %v602, %v604
      %v610 = vmul.f32 %v245, %v602
      %v611 = vmul.f32 %v246, %v606
      %v612 = vmul.f32 %v247, %v604
      %v613 = vmul.f32 %v248, %v602
      %v614 = vmul.f32 %v249, %v606
      %v615 = vmul.f32 %v250, %v604
      %s616 = scalar_lea.vmem %s1, 80
      %v617 = vld [vmem:[%s616] sm:$0xff]
      %v618 = vld [vmem:[%s616 + $0x8] sm:$0xf]
      %620 = vset.pattern.permute.xlu0 0
      %621 = vperm.xlu0 %620, %v617
      %v622 = vpop.permute.xlu0 %621
      %625 = vset.pattern.permute.xlu0 0
      %626 = vperm.xlu0 %625, %v618
      %v627 = vpop.permute.xlu0 %626
      %v629 = vmul.f32 %v622, %v610
      %v630 = vmul.f32 %v622, %v611
      %v631 = vmul.f32 %v622, %v612
      %v632 = vmul.f32 %v627, %v613
      %v633 = vmul.f32 %v627, %v614
      %v634 = vmul.f32 %v627, %v615
      %641 = vrot.lane.b32.xlu0 %v629, 110
      %v642 = vpop.permute.xlu0 %641
      %643 = vrot.lane.b32.xlu0 %v630, 110
      %v644 = vpop.permute.xlu0 %643
      %645 = vrot.lane.b32.xlu0 %v631, 110
      %v646 = vpop.permute.xlu0 %645
      %647 = vrot.lane.b32.xlu0 %v632, 110
      %v648 = vpop.permute.xlu0 %647
      %649 = vrot.lane.b32.xlu0 %v633, 110
      %v650 = vpop.permute.xlu0 %649
      %651 = vrot.lane.b32.xlu0 %v634, 110
      %v652 = vpop.permute.xlu0 %651
      %vm653 = vcmask 900096
      %v654 = vsel %vm653, %v642, %v644
      %v655 = vsel %vm653, %v644, %v646
      %v656 = vsel %vm653, %v648, %v650
      %v657 = vsel %vm653, %v650, %v652
      %v662 = vadd.f32 %v597, %v654
      %v663 = vadd.f32 %v598, %v655
      %v664 = vadd.f32 %v599, %v656
      %v665 = vadd.f32 %v600, %v657
      %666 = vrot.lane.b32.xlu0 %v534, 34
      %v667 = vpop.permute.xlu0 %666
      %668 = vrot.lane.b32.xlu0 %v535, 34
      %v669 = vpop.permute.xlu0 %668
      %vm670 = vcmask 277504
      %v671 = vsel %vm670, %v667, %v669
      %v675 = vmul.f32 %v245, %v667
      %v676 = vmul.f32 %v246, %v671
      %v677 = vmul.f32 %v247, %v669
      %v678 = vmul.f32 %v248, %v667
      %v679 = vmul.f32 %v249, %v671
      %v680 = vmul.f32 %v250, %v669
      %s681 = scalar_lea.vmem %s1, 128
      %v682 = vld [vmem:[%s681] sm:$0xff]
      %v683 = vld [vmem:[%s681 + $0x8] sm:$0xf]
      %685 = vset.pattern.permute.xlu0 0
      %686 = vperm.xlu0 %685, %v682
      %v687 = vpop.permute.xlu0 %686
      %690 = vset.pattern.permute.xlu0 0
      %691 = vperm.xlu0 %690, %v683
      %v692 = vpop.permute.xlu0 %691
      %v694 = vmul.f32 %v687, %v675
      %v695 = vmul.f32 %v687, %v676
      %v696 = vmul.f32 %v687, %v677
      %v697 = vmul.f32 %v692, %v678
      %v698 = vmul.f32 %v692, %v679
      %v699 = vmul.f32 %v692, %v680
      %706 = vrot.lane.b32.xlu0 %v694, 94
      %v707 = vpop.permute.xlu0 %706
      %708 = vrot.lane.b32.xlu0 %v695, 94
      %v709 = vpop.permute.xlu0 %708
      %710 = vrot.lane.b32.xlu0 %v696, 94
      %v711 = vpop.permute.xlu0 %710
      %712 = vrot.lane.b32.xlu0 %v697, 94
      %v713 = vpop.permute.xlu0 %712
      %714 = vrot.lane.b32.xlu0 %v698, 94
      %v715 = vpop.permute.xlu0 %714
      %716 = vrot.lane.b32.xlu0 %v699, 94
      %v717 = vpop.permute.xlu0 %716
      %vm718 = vcmask 769024
      %v719 = vsel %vm718, %v707, %v709
      %v720 = vsel %vm718, %v709, %v711
      %v721 = vsel %vm718, %v713, %v715
      %v722 = vsel %vm718, %v715, %v717
      %v727 = vadd.f32 %v662, %v719
      %v728 = vadd.f32 %v663, %v720
      %v729 = vadd.f32 %v664, %v721
      %v730 = vadd.f32 %v665, %v722
      %731 = vst [vmem:[%s170] sm:$0xff] %v727
      %732 = vst [vmem:[%s170 + $0x8] sm:$0xff] %v728
      %733 = vst [vmem:[%s170 + $0x10] sm:$0xf] %v729
      %734 = vst [vmem:[%s170 + $0x18] sm:$0xf] %v730
      %p735 = scmp.lt.s32.totalorder %s14, 1
      %s736 = scalar_select %p735, %s14, 1
      %s737 = smul.addr %s736, 4
      %s738 = smul.addr %s737, 8
      %s739 = scalar_lea.vmem %s3, %s738
      // Predicated region
      $region33: #{tpu_custom_call.1} parent=31 // pred_check
        %p740 = pneg %p100
      $region34: #{tpu_custom_call.1} parent=31 // pred_check_branch
        %742 = sbr.rel (%p740) target = $region36
      $region35: #{tpu_custom_call.1} parent=31 // pred_region
        _
      $region36: #{tpu_custom_call.1} parent=31 // pred_fallthru
        _
    $region32: #{tpu_custom_call.1} parent=5 // pred_fallthru
      _
    %p743 = scmp.le.s32.totalorder 2, %s9
    // Predicated region
    $region37: #{tpu_custom_call.1} parent=5 // pred_check
      %p744 = pneg %p743
    $region38: #{tpu_custom_call.1} parent=5 // pred_check_branch
      %746 = sbr.rel (%p744) target = $region40
    $region39: #{tpu_custom_call.1} parent=5 // pred_region
      %s747 = ssub.s32 %s9, 2
      // Predicated region
      $region41: #{tpu_custom_call.1} parent=39 // pred_check
        %p748 = pneg %p106
      $region42: #{tpu_custom_call.1} parent=39 // pred_check_branch
        %750 = sbr.rel (%p748) target = $region44
      $region43: #{tpu_custom_call.1} parent=39 // pred_region
        %p751 = scmp.lt.s32.totalorder %s15, 1
        %s752 = scalar_select %p751, %s15, 1
        %s753 = smul.addr %s752, 4
        %s754 = smul.addr %s753, 8
        %s755 = scalar_lea.vmem %s3, %s754
      $region44: #{tpu_custom_call.1} parent=39 // pred_fallthru
        _
    $region40: #{tpu_custom_call.1} parent=5 // pred_fallthru
      _
  $region6: #{tpu_custom_call.1} parent=0 // loop_footer
    %s13 = sadd.s32 1, %s9
  $region7: #{tpu_custom_call.1} parent=0 // loop_footer_branch
    %8 = sbr.rel target = $region3
  $region8: #{tpu_custom_call.1} parent=0 // loop_exit
    _

</llo_original>
